<compile_context>
chip_gen: v7x
topology: tpu7x:2x2x1
jax: 0.10.0
libtpu: 0.0.40
codegen_flags: <defaults>
</compile_context>

<pallas_src>
import functools
import math

import jax
import jax.numpy as jnp
from jax.experimental import pallas as pl
from jax.experimental.pallas import tpu as pltpu

NUM_HEADS = 1  # module global `num_heads = 1`


def _block_diag(mat, reps):
    """Trace-time block-diagonal replication of a small matrix."""
    h, w = mat.shape
    out = jnp.zeros((reps * h, reps * w), mat.dtype)
    for t in range(reps):
        out = out.at[t * h:(t + 1) * h, t * w:(t + 1) * w].set(mat)
    return out


def _attn_kernel(x_ref, w_ref, b_ref, seg_ref, o_ref, *, scale, attn_mask):
    # x_ref:  (TM, FH)   folded token tile (F tokens per row, FH = F*H lanes)
    # w_ref:  (FH, 3*FH) grouped block-diag weights -> columns [Q | K | V]
    # b_ref:  (1, 3*FH)  grouped bias
    # seg_ref:(FH, FH)   block-diag ones (per-token segment sum + broadcast)
    fh = seg_ref.shape[0]

    qkv = jnp.dot(x_ref[...], w_ref[...],
                  preferred_element_type=jnp.float32) + b_ref[...]   # (TM, 3FH)

    # vreg-aligned slices (offsets are multiples of 128 when FH == 128)
    q = qkv[:, :fh]
    k = qkv[:, fh:2 * fh]
    v = qkv[:, 2 * fh:]

    # Per-token q.k, summed within each token's lane segment and broadcast back
    # over that segment, via one small MXU matmul (MXU is otherwise idle).
    qk = jnp.dot(q * k, seg_ref[...],
                 preferred_element_type=jnp.float32) * scale + attn_mask

    # softmax over a size-1 head axis == 1.0 for finite qk, NaN otherwise.
    finite = jnp.abs(qk) < jnp.inf            # False for +/-inf and NaN
    attn = jnp.where(finite, jnp.float32(1.0), jnp.float32(jnp.nan))

    # attn_weight @ v  (1x1 @ 1xH per token) == attn * v, lane-dense output.
    o_ref[...] = (attn * v).astype(o_ref.dtype)


def model1_forward(query, w, b, attn_mask=1.0, *, tile_rows=2048):
    """query: (B, S, H) f32; w: (H, 3H); b: (3H,); attn_mask: python scalar."""
    B, S, H = query.shape
    N = B * S

    # Fold F tokens per row so the last dim fills the 128-lane vreg.
    F = 1
    if H < 128 and 128 % H == 0:
        F = 128 // H
        while F > 1 and (N % F) != 0:
            F //= 2
    Nf = N // F
    FH = F * H

    # Free, row-major-contiguous reshape (no data movement in HBM).
    x = query.reshape(Nf, FH)

    # Grouped weights: columns are [Q-block-diag | K-block-diag | V-block-diag].
    wq, wk, wv = w[:, :H], w[:, H:2 * H], w[:, 2 * H:]
    w_g = jnp.concatenate(
        [_block_diag(wq, F), _block_diag(wk, F), _block_diag(wv, F)], axis=1)
    bq, bk, bv = b[:H], b[H:2 * H], b[2 * H:]
    b_g = jnp.concatenate(
        [jnp.tile(bq, F), jnp.tile(bk, F), jnp.tile(bv, F)]).reshape(1, 3 * FH)

    # Block-diagonal ones: segment-sum + broadcast matrix for per-token q.k.
    tok = jnp.arange(FH) // H
    seg = (tok[:, None] == tok[None, :]).astype(jnp.float32)

    # Tile selection: biggest tile that keeps VMEM modest; no input padding —
    # a ragged edge block is handled by Pallas (masked writes, per-row ops).
    if Nf <= tile_rows:
        tm = Nf                    # single full-extent block (always legal)
        grid_len = 1
    else:
        tm = tile_rows             # multiple of 8
        grid_len = pl.cdiv(Nf, tm)

    scale = 1.0 / math.sqrt(H // NUM_HEADS)
    kernel = functools.partial(_attn_kernel, scale=scale,
                               attn_mask=float(attn_mask))

    out = pl.pallas_call(
        kernel,
        out_shape=jax.ShapeDtypeStruct((Nf, FH), query.dtype),
        grid_spec=pltpu.PrefetchScalarGridSpec(
            num_scalar_prefetch=0,
            grid=(grid_len,),
            in_specs=[
                pl.BlockSpec((tm, FH), lambda i: (i, 0)),        # folded tokens
                pl.BlockSpec((FH, 3 * FH), lambda i: (0, 0)),    # W (resident)
                pl.BlockSpec((1, 3 * FH), lambda i: (0, 0)),     # bias (resident)
                pl.BlockSpec((FH, FH), lambda i: (0, 0)),        # segment ones
            ],
            out_specs=pl.BlockSpec((tm, FH), lambda i: (i, 0)),  # lane-dense out
        ),
        compiler_params=pltpu.CompilerParams(
            dimension_semantics=("parallel",),
            vmem_limit_bytes=32 * 1024 * 1024),
    )(x, w_g, b_g, seg)

    return out.reshape(B, S, H)


def _reference(query, w, b, attn_mask):
    # Pure-JAX reference mirroring the PyTorch forward (eval-mode dropout).
    B, S, H = query.shape
    qkv = query @ w + b
    q, k, v = jnp.split(qkv, 3, axis=-1)
    q = q.reshape(B, S, NUM_HEADS, -1)
    k = k.reshape(B, S, NUM_HEADS, -1)
    v = v.reshape(B, S, NUM_HEADS, -1)
    qk = jnp.einsum("bsnd,bsmd->bsnm", q, k) / math.sqrt(k.shape[-1])
    qk = qk + attn_mask
    attn = jax.nn.softmax(qk, axis=-1)
    o = jnp.einsum("bsnm,bsmd->bsnd", attn, v)
    return o.reshape(B, S, -1)


if __name__ == "__main__":
    B, S, H = 2, 8, 32          # small shapes consistent with (B, S, hidden)
    key = jax.random.PRNGKey(0)
    k_q, k_w, k_b = jax.random.split(key, 3)

    query = jax.random.normal(k_q, (B, S, H), dtype=jnp.float32)
    # key/value args exist in the PyTorch signature but are unused by forward.
    key_in = jnp.zeros((B, S, H), jnp.float32)
    value_in = jnp.zeros((B, S, H), jnp.float32)

    # Deterministic Linear init (PyTorch-style uniform(-1/sqrt(H), 1/sqrt(H)))
    bound = 1.0 / math.sqrt(H)
    w = jax.random.uniform(k_w, (H, 3 * H), jnp.float32, -bound, bound)
    b = jax.random.uniform(k_b, (3 * H,), jnp.float32, -bound, bound)

    attn_mask = 1.0  # module global `attn_mask = 1`

    out = model1_forward(query, w, b, attn_mask)
    out = jax.block_until_ready(out)

    ref = _reference(query, w, b, attn_mask)
    assert out.shape == (B, S, H)
    assert jnp.allclose(out, ref, atol=1e-5, rtol=1e-5), "mismatch vs reference"

    print("KERNEL_OK")
</pallas_src>

<mosaic_0001>
module attributes {stable_mosaic.version = 11 : i64} {
  func.func @_attn_kernel(%arg0: i32, %arg1: memref<4x128xf32, #tpu.memory_space<vmem>>, %arg2: memref<128x384xf32, #tpu.memory_space<vmem>>, %arg3: memref<1x384xf32, #tpu.memory_space<vmem>>, %arg4: memref<128x128xf32, #tpu.memory_space<vmem>>, %arg5: memref<4x128xf32, #tpu.memory_space<vmem>>) attributes {dimension_semantics = [#tpu.dimension_semantics<parallel>], iteration_bounds = array<i64: 1>, scalar_prefetch = 0 : i64, scratch_operands = 0 : i64, tpu.core_type = #tpu.core_type<tc>, window_params = [{transform_indices = @transform_0, window_bounds = array<i64: 4, 128>}, {pipeline_mode = #tpu.pipeline_mode<synchronous>, transform_indices = @transform_1, window_bounds = array<i64: 128, 384>}, {pipeline_mode = #tpu.pipeline_mode<synchronous>, transform_indices = @transform_2, window_bounds = array<i64: 1, 384>}, {pipeline_mode = #tpu.pipeline_mode<synchronous>, transform_indices = @transform_3, window_bounds = array<i64: 128, 128>}, {transform_indices = @transform_4, window_bounds = array<i64: 4, 128>}]} {
    %c0 = arith.constant 0 : index
    %c0_0 = arith.constant 0 : index
    %0 = vector.load %arg1[%c0, %c0_0] : memref<4x128xf32, #tpu.memory_space<vmem>>, vector<4x128xf32>
    %c0_1 = arith.constant 0 : index
    %c0_2 = arith.constant 0 : index
    %1 = vector.load %arg2[%c0_1, %c0_2] : memref<128x384xf32, #tpu.memory_space<vmem>>, vector<128x384xf32>
    %cst = arith.constant dense<0.000000e+00> : vector<4x384xf32>
    %2 = tpu.matmul %0, %1, %cst {dimension_numbers = #tpu.dot_dimension_numbers<[1], [0], [0], [1], [0, 0, 1, 1], [], []>} : vector<4x128xf32>, vector<128x384xf32>, vector<4x384xf32> -> vector<4x384xf32>
    %c0_3 = arith.constant 0 : index
    %c0_4 = arith.constant 0 : index
    %3 = vector.load %arg3[%c0_3, %c0_4] : memref<1x384xf32, #tpu.memory_space<vmem>>, vector<1x384xf32>
    %4 = vector.broadcast %3 : vector<1x384xf32> to vector<4x384xf32>
    %5 = arith.addf %2, %4 : vector<4x384xf32>
    %6 = vector.extract_strided_slice %5 {offsets = [0, 0], sizes = [4, 128], strides = [1, 1]} : vector<4x384xf32> to vector<4x128xf32>
    %7 = vector.extract_strided_slice %5 {offsets = [0, 128], sizes = [4, 128], strides = [1, 1]} : vector<4x384xf32> to vector<4x128xf32>
    %8 = vector.extract_strided_slice %5 {offsets = [0, 256], sizes = [4, 128], strides = [1, 1]} : vector<4x384xf32> to vector<4x128xf32>
    %9 = arith.mulf %6, %7 : vector<4x128xf32>
    %c0_5 = arith.constant 0 : index
    %c0_6 = arith.constant 0 : index
    %10 = vector.load %arg4[%c0_5, %c0_6] : memref<128x128xf32, #tpu.memory_space<vmem>>, vector<128x128xf32>
    %cst_7 = arith.constant dense<0.000000e+00> : vector<4x128xf32>
    %11 = tpu.matmul %9, %10, %cst_7 {dimension_numbers = #tpu.dot_dimension_numbers<[1], [0], [0], [1], [0, 0, 1, 1], [], []>} : vector<4x128xf32>, vector<128x128xf32>, vector<4x128xf32> -> vector<4x128xf32>
    %cst_8 = arith.constant 0.176776692 : f32
    %12 = vector.broadcast %cst_8 : f32 to vector<4x128xf32>
    %13 = arith.mulf %11, %12 : vector<4x128xf32>
    %cst_9 = arith.constant 1.000000e+00 : f32
    %14 = vector.broadcast %cst_9 : f32 to vector<4x128xf32>
    %15 = arith.addf %13, %14 : vector<4x128xf32>
    %16 = math.absf %15 : vector<4x128xf32>
    %cst_10 = arith.constant 0x7F800000 : f32
    %17 = vector.broadcast %cst_10 : f32 to vector<4x128xf32>
    %18 = arith.cmpf olt, %16, %17 : vector<4x128xf32>
    %cst_11 = arith.constant 1.000000e+00 : f32
    %cst_12 = arith.constant 0x7FC00000 : f32
    %19 = vector.broadcast %cst_11 : f32 to vector<4x128xf32>
    %20 = vector.broadcast %cst_12 : f32 to vector<4x128xf32>
    %21 = arith.select %18, %19, %20 : vector<4x128xi1>, vector<4x128xf32>
    %22 = arith.mulf %21, %8 : vector<4x128xf32>
    %c0_13 = arith.constant 0 : index
    %c0_14 = arith.constant 0 : index
    %23 = vector.load %arg5[%c0_13, %c0_14] : memref<4x128xf32, #tpu.memory_space<vmem>>, vector<4x128xf32>
    tpu.vector_store %arg5[%c0_13, %c0_14], %22 {strides = array<i32>} : memref<4x128xf32, #tpu.memory_space<vmem>>, vector<4x128xf32>,
    return
  }
  func.func @transform_0(%arg0: i32) -> (i32, i32) {
    %c0_i32 = arith.constant 0 : i32
    %c0_i32_0 = arith.constant 0 : i32
    return %arg0, %c0_i32 : i32, i32
  }
  func.func @transform_1(%arg0: i32) -> (i32, i32) {
    %c0_i32 = arith.constant 0 : i32
    %c0_i32_0 = arith.constant 0 : i32
    %c0_i32_1 = arith.constant 0 : i32
    return %c0_i32, %c0_i32_0 : i32, i32
  }
  func.func @transform_2(%arg0: i32) -> (i32, i32) {
    %c0_i32 = arith.constant 0 : i32
    %c0_i32_0 = arith.constant 0 : i32
    %c0_i32_1 = arith.constant 0 : i32
    return %c0_i32, %c0_i32_0 : i32, i32
  }
  func.func @transform_3(%arg0: i32) -> (i32, i32) {
    %c0_i32 = arith.constant 0 : i32
    %c0_i32_0 = arith.constant 0 : i32
    %c0_i32_1 = arith.constant 0 : i32
    return %c0_i32, %c0_i32_0 : i32, i32
  }
  func.func @transform_4(%arg0: i32) -> (i32, i32) {
    %c0_i32 = arith.constant 0 : i32
    %c0_i32_0 = arith.constant 0 : i32
    return %arg0, %c0_i32 : i32, i32
  }
}

</mosaic_0001>

<llo_original>
// kernel: tpu_custom_call.1
$region0: #{tpu_custom_call.1}
  #allocation0 [shape = 'u32[]', space=smem, size = 0x4, offset = 0x4, fixed_abs, tag = 'smem constant byte address 0x4 - core index']
  #allocation1 [shape = 'u32[144,128]{1,0:T(1,128)}', space=vmem, size = 0x12000, scoped, tag = 'internal scratch']
  %s0 = inlined_call_operand.hbm [shape: f32[4,128], index: 0, kind: input, shape index: {}]
  %s1 = inlined_call_operand.hbm [shape: f32[128,384], index: 1, kind: input, shape index: {}]
  %s2 = inlined_call_operand.vmem [shape: f32[1,384], index: 2, kind: input, shape index: {}]
  %s3 = inlined_call_operand.hbm [shape: f32[128,128], index: 3, kind: input, shape index: {}]
  %s4 = inlined_call_operand.hbm [shape: f32[4,128], index: 4, kind: output, shape index: {}]
  %s5 = sld [smem:[#allocation0]]
  $region38: #{tpu_custom_call.1} parent=0
    _
  %s7 = ssub.s32 1, %s5
  %s8 = scalar_select 0, %s7, %s5
  $region1: #{tpu_custom_call.1} parent=0
    #allocation2 [shape = 'u8[2048]{0}', space=vmem, size = 0x800, scoped, tag = 'input window, operand 0, single buffered']
    #allocation3 [shape = 's32[1]{0}', space=sflag, size = 0x4, scoped, tag = 'scoped memory for tpu_custom_call.1']
    #allocation4 [shape = 's32[1]{0}', space=sflag, size = 0x4, scoped, tag = 'scoped memory for tpu_custom_call.1']
    #allocation5 [shape = 'u8[196608]{0}', space=vmem, size = 0x30000, scoped, tag = 'input window, operand 1, single buffered']
    #allocation6 [shape = 's32[1]{0}', space=sflag, size = 0x4, scoped, tag = 'scoped memory for tpu_custom_call.1']
    #allocation7 [shape = 'u8[65536]{0}', space=vmem, size = 0x10000, scoped, tag = 'input window, operand 3, single buffered']
    #allocation8 [shape = 'u8[2048]{0}', space=vmem, size = 0x800, scoped, tag = 'output window, operand 0, single buffered']
    %9 = vsyncpa [#allocation3], 0
    %10 = vsyncpa [#allocation6], 0
    %11 = vsyncpa [#allocation4], 0
    // Predicated region
    $region2: #{tpu_custom_call.1} parent=1 // pred_check
      _
    $region3: #{tpu_custom_call.1} parent=1 // pred_check_branch
      %13 = sbr.rel (0) target = $region5
    $region4: #{tpu_custom_call.1} parent=1 // pred_region
      %s15 = ssub.s32 64, 64
      %16 = vsyncadd [#allocation3], %s15
      %s18 = sshll.u32 [#allocation2], 4
      %s19 = int_to_ptr.vmem [resolvable:$true] %s18
      %21 = dma.hbm_to_vmem [thread:$0]  %s0, 64, %s19, [#allocation3]
    $region5: #{tpu_custom_call.1} parent=1 // pred_fallthru
      _
    // Predicated region
    $region6: #{tpu_custom_call.1} parent=1 // pred_check
      _
    $region7: #{tpu_custom_call.1} parent=1 // pred_check_branch
      %23 = sbr.rel (0) target = $region9
    $region8: #{tpu_custom_call.1} parent=1 // pred_region
      %s25 = ssub.s32 6144, 6144
      %26 = vsyncadd [#allocation6], %s25
      %s27 = sshll.u32 [#allocation5], 4
      %s28 = int_to_ptr.vmem [resolvable:$true] %s27
      %33 = dma.hbm_to_vmem [thread:$0]  %s1, 6144, %s28, [#allocation6], 384, 384, 24
    $region9: #{tpu_custom_call.1} parent=1 // pred_fallthru
      _
    // Predicated region
    $region10: #{tpu_custom_call.1} parent=1 // pred_check
      _
    $region11: #{tpu_custom_call.1} parent=1 // pred_check_branch
      %35 = sbr.rel (0) target = $region13
    $region12: #{tpu_custom_call.1} parent=1 // pred_region
      _
    $region13: #{tpu_custom_call.1} parent=1 // pred_fallthru
      _
    // Predicated region
    $region14: #{tpu_custom_call.1} parent=1 // pred_check
      _
    $region15: #{tpu_custom_call.1} parent=1 // pred_check_branch
      %37 = sbr.rel (0) target = $region17
    $region16: #{tpu_custom_call.1} parent=1 // pred_region
      %s39 = ssub.s32 2048, 2048
      %40 = vsyncadd [#allocation6], %s39
      %s41 = sshll.u32 [#allocation7], 4
      %s42 = int_to_ptr.vmem [resolvable:$true] %s41
      %47 = dma.hbm_to_vmem [thread:$0]  %s3, 2048, %s42, [#allocation6], 128, 128, 8
    $region17: #{tpu_custom_call.1} parent=1 // pred_fallthru
      _
    // Predicated region
    $region18: #{tpu_custom_call.1} parent=1 // pred_check
      _
    $region19: #{tpu_custom_call.1} parent=1 // pred_check_branch
      %49 = sbr.rel (0) target = $region21
    $region20: #{tpu_custom_call.1} parent=1 // pred_region
      %50 = dma.done [#allocation3], 64
    $region21: #{tpu_custom_call.1} parent=1 // pred_fallthru
      _
    // Predicated region
    $region22: #{tpu_custom_call.1} parent=1 // pred_check
      _
    $region23: #{tpu_custom_call.1} parent=1 // pred_check_branch
      %52 = sbr.rel (0) target = $region25
    $region24: #{tpu_custom_call.1} parent=1 // pred_region
      %53 = dma.done [#allocation6], 6144
    $region25: #{tpu_custom_call.1} parent=1 // pred_fallthru
      _
    // Predicated region
    $region26: #{tpu_custom_call.1} parent=1 // pred_check
      _
    $region27: #{tpu_custom_call.1} parent=1 // pred_check_branch
      %55 = sbr.rel (0) target = $region29
    $region28: #{tpu_custom_call.1} parent=1 // pred_region
      %56 = dma.done [#allocation6], 2048
    $region29: #{tpu_custom_call.1} parent=1 // pred_fallthru
      _
    %v57 = vld [vmem:[#allocation2] sm:$0xf]
    %v58 = vld [vmem:[#allocation5] sm:$0xff]
    %v59 = vld [vmem:[#allocation5 + $0x8] sm:$0xff]
    %v60 = vld [vmem:[#allocation5 + $0x10] sm:$0xff]
    %v61 = vld [vmem:[#allocation5 + $0x18] sm:$0xff]
    %v62 = vld [vmem:[#allocation5 + $0x20] sm:$0xff]
    %v63 = vld [vmem:[#allocation5 + $0x28] sm:$0xff]
    %v64 = vld [vmem:[#allocation5 + $0x30] sm:$0xff]
    %v65 = vld [vmem:[#allocation5 + $0x38] sm:$0xff]
    %v66 = vld [vmem:[#allocation5 + $0x40] sm:$0xff]
    %v67 = vld [vmem:[#allocation5 + $0x48] sm:$0xff]
    %v68 = vld [vmem:[#allocation5 + $0x50] sm:$0xff]
    %v69 = vld [vmem:[#allocation5 + $0x58] sm:$0xff]
    %v70 = vld [vmem:[#allocation5 + $0x60] sm:$0xff]
    %v71 = vld [vmem:[#allocation5 + $0x68] sm:$0xff]
    %v72 = vld [vmem:[#allocation5 + $0x70] sm:$0xff]
    %v73 = vld [vmem:[#allocation5 + $0x78] sm:$0xff]
    %v74 = vld [vmem:[#allocation5 + $0x80] sm:$0xff]
    %v75 = vld [vmem:[#allocation5 + $0x88] sm:$0xff]
    %v76 = vld [vmem:[#allocation5 + $0x90] sm:$0xff]
    %v77 = vld [vmem:[#allocation5 + $0x98] sm:$0xff]
    %v78 = vld [vmem:[#allocation5 + $0xa0] sm:$0xff]
    %v79 = vld [vmem:[#allocation5 + $0xa8] sm:$0xff]
    %v80 = vld [vmem:[#allocation5 + $0xb0] sm:$0xff]
    %v81 = vld [vmem:[#allocation5 + $0xb8] sm:$0xff]
    %v82 = vld [vmem:[#allocation5 + $0xc0] sm:$0xff]
    %v83 = vld [vmem:[#allocation5 + $0xc8] sm:$0xff]
    %v84 = vld [vmem:[#allocation5 + $0xd0] sm:$0xff]
    %v85 = vld [vmem:[#allocation5 + $0xd8] sm:$0xff]
    %v86 = vld [vmem:[#allocation5 + $0xe0] sm:$0xff]
    %v87 = vld [vmem:[#allocation5 + $0xe8] sm:$0xff]
    %v88 = vld [vmem:[#allocation5 + $0xf0] sm:$0xff]
    %v89 = vld [vmem:[#allocation5 + $0xf8] sm:$0xff]
    %v90 = vld [vmem:[#allocation5 + $0x100] sm:$0xff]
    %v91 = vld [vmem:[#allocation5 + $0x108] sm:$0xff]
    %v92 = vld [vmem:[#allocation5 + $0x110] sm:$0xff]
    %v93 = vld [vmem:[#allocation5 + $0x118] sm:$0xff]
    %v94 = vld [vmem:[#allocation5 + $0x120] sm:$0xff]
    %v95 = vld [vmem:[#allocation5 + $0x128] sm:$0xff]
    %v96 = vld [vmem:[#allocation5 + $0x130] sm:$0xff]
    %v97 = vld [vmem:[#allocation5 + $0x138] sm:$0xff]
    %v98 = vld [vmem:[#allocation5 + $0x140] sm:$0xff]
    %v99 = vld [vmem:[#allocation5 + $0x148] sm:$0xff]
    %v100 = vld [vmem:[#allocation5 + $0x150] sm:$0xff]
    %v101 = vld [vmem:[#allocation5 + $0x158] sm:$0xff]
    %v102 = vld [vmem:[#allocation5 + $0x160] sm:$0xff]
    %v103 = vld [vmem:[#allocation5 + $0x168] sm:$0xff]
    %v104 = vld [vmem:[#allocation5 + $0x170] sm:$0xff]
    %v105 = vld [vmem:[#allocation5 + $0x178] sm:$0xff]
    %v106 = vld [vmem:[%s2] sm:$0x7]
    %v108 = vlaneseq
    %v109 = vshrl.u32 %v108, 7
    %v110 = vsub.s32 0, %v109
    %v111 = vrot.slane %v106, %v110
    %v112 = vlaneseq
    %v113 = vshrl.u32 %v112, 7
    %v114 = vsub.s32 1, %v113
    %v115 = vrot.slane %v106, %v114
    %v116 = vlaneseq
    %v117 = vshrl.u32 %v116, 7
    %v118 = vsub.s32 2, %v117
    %v119 = vrot.slane %v106, %v118
    %123 = vmatprep.subr.mxu0 %v59
    %124 = vmatpush1.msra.mxu0 %v58
    %125 = vmatprep.subr.mxu0 %v62
    %126 = vmatpush1.msra.mxu0 %v61
    %127 = vmatprep.subr.mxu0 %v65
    %128 = vmatpush1.msra.mxu0 %v64
    %129 = vmatprep.subr.mxu0 %v68
    %130 = vmatpush1.msra.mxu0 %v67
    %131 = vmatprep.subr.mxu0 %v71
    %132 = vmatpush1.msra.mxu0 %v70
    %133 = vmatprep.subr.mxu0 %v74
    %134 = vmatpush1.msra.mxu0 %v73
    %135 = vmatprep.subr.mxu0 %v77
    %136 = vmatpush1.msra.mxu0 %v76
    %137 = vmatprep.subr.mxu0 %v80
    %138 = vmatpush1.msra.mxu0 %v79
    %139 = vmatprep.subr.mxu0 %v83
    %140 = vmatpush1.msra.mxu0 %v82
    %141 = vmatprep.subr.mxu0 %v86
    %142 = vmatpush1.msra.mxu0 %v85
    %143 = vmatprep.subr.mxu0 %v89
    %144 = vmatpush1.msra.mxu0 %v88
    %145 = vmatprep.subr.mxu0 %v92
    %146 = vmatpush1.msra.mxu0 %v91
    %147 = vmatprep.subr.mxu0 %v95
    %148 = vmatpush1.msra.mxu0 %v94
    %149 = vmatprep.subr.mxu0 %v98
    %150 = vmatpush1.msra.mxu0 %v97
    %151 = vmatprep.subr.mxu0 %v101
    %152 = vmatpush1.msra.mxu0 %v100
    %153 = vmatprep.subr.mxu0 %v104
    %154 = vmatpush1.msra.mxu0 %v103
    %155 = vmatprep.subr.mxu0 0.0
    %156 = vmatpush1.msra.mxu0 0.0
    %157 = vmatprep.subr.mxu0 0.0
    %158 = vmatpush1.msra.mxu0 0.0
    %159 = vmatprep.subr.mxu0 0.0
    %160 = vmatpush1.msra.mxu0 0.0
    %161 = vmatprep.subr.mxu0 0.0
    %162 = vmatpush1.msra.mxu0 0.0
    %163 = vmatprep.subr.mxu0 0.0
    %164 = vmatpush1.msra.mxu0 0.0
    %165 = vmatprep.subr.mxu0 0.0
    %166 = vmatpush1.msra.mxu0 0.0
    %167 = vmatprep.subr.mxu0 0.0
    %168 = vmatpush1.msra.mxu0 0.0
    %169 = vmatprep.subr.mxu0 0.0
    %170 = vmatpush1.msra.mxu0 0.0
    %171 = vmatprep.subr.mxu0 0.0
    %172 = vmatpush1.msra.mxu0 0.0
    %173 = vmatprep.subr.mxu0 0.0
    %174 = vmatpush1.msra.mxu0 0.0
    %175 = vmatprep.subr.mxu0 0.0
    %176 = vmatpush1.msra.mxu0 0.0
    %177 = vmatprep.subr.mxu0 0.0
    %178 = vmatpush1.msra.mxu0 0.0
    %179 = vmatprep.subr.mxu0 0.0
    %180 = vmatpush1.msra.mxu0 0.0
    %181 = vmatprep.subr.mxu0 0.0
    %182 = vmatpush1.msra.mxu0 0.0
    %183 = vmatprep.subr.mxu0 0.0
    %184 = vmatpush1.msra.mxu0 0.0
    %185 = vmatprep.subr.mxu0 0.0
    %186 = vmatpush1.msra.mxu0 0.0
    %187 = vmatprep.mubr.f32.mxu0 0.0
    %188 = vmatmul.mubr.f32.gmra.mrb[0].mxu0 %v57
    %v189 = vpop.f32.mrb[0].mxu0
    %v190 = vadd.f32 %v111, %v189
    %v191 = vpop.f32.mrb[0].mxu0
    %v192 = vadd.f32 %v115, %v191
    %193 = vdwg.mxu0
    %194 = vmatprep.subr.mxu0 0.0
    %195 = vmatpush1.msra.mxu0 %v60
    %196 = vmatprep.subr.mxu0 0.0
    %197 = vmatpush1.msra.mxu0 %v63
    %198 = vmatprep.subr.mxu0 0.0
    %199 = vmatpush1.msra.mxu0 %v66
    %200 = vmatprep.subr.mxu0 0.0
    %201 = vmatpush1.msra.mxu0 %v69
    %202 = vmatprep.subr.mxu0 0.0
    %203 = vmatpush1.msra.mxu0 %v72
    %204 = vmatprep.subr.mxu0 0.0
    %205 = vmatpush1.msra.mxu0 %v75
    %206 = vmatprep.subr.mxu0 0.0
    %207 = vmatpush1.msra.mxu0 %v78
    %208 = vmatprep.subr.mxu0 0.0
    %209 = vmatpush1.msra.mxu0 %v81
    %210 = vmatprep.subr.mxu0 0.0
    %211 = vmatpush1.msra.mxu0 %v84
    %212 = vmatprep.subr.mxu0 0.0
    %213 = vmatpush1.msra.mxu0 %v87
    %214 = vmatprep.subr.mxu0 0.0
    %215 = vmatpush1.msra.mxu0 %v90
    %216 = vmatprep.subr.mxu0 0.0
    %217 = vmatpush1.msra.mxu0 %v93
    %218 = vmatprep.subr.mxu0 0.0
    %219 = vmatpush1.msra.mxu0 %v96
    %220 = vmatprep.subr.mxu0 0.0
    %221 = vmatpush1.msra.mxu0 %v99
    %222 = vmatprep.subr.mxu0 0.0
    %223 = vmatpush1.msra.mxu0 %v102
    %224 = vmatprep.subr.mxu0 0.0
    %225 = vmatpush1.msra.mxu0 %v105
    %226 = vmatprep.subr.mxu0 0.0
    %227 = vmatpush1.msra.mxu0 0.0
    %228 = vmatprep.subr.mxu0 0.0
    %229 = vmatpush1.msra.mxu0 0.0
    %230 = vmatprep.subr.mxu0 0.0
    %231 = vmatpush1.msra.mxu0 0.0
    %232 = vmatprep.subr.mxu0 0.0
    %233 = vmatpush1.msra.mxu0 0.0
    %234 = vmatprep.subr.mxu0 0.0
    %235 = vmatpush1.msra.mxu0 0.0
    %236 = vmatprep.subr.mxu0 0.0
    %237 = vmatpush1.msra.mxu0 0.0
    %238 = vmatprep.subr.mxu0 0.0
    %239 = vmatpush1.msra.mxu0 0.0
    %240 = vmatprep.subr.mxu0 0.0
    %241 = vmatpush1.msra.mxu0 0.0
    %242 = vmatprep.subr.mxu0 0.0
    %243 = vmatpush1.msra.mxu0 0.0
    %244 = vmatprep.subr.mxu0 0.0
    %245 = vmatpush1.msra.mxu0 0.0
    %246 = vmatprep.subr.mxu0 0.0
    %247 = vmatpush1.msra.mxu0 0.0
    %248 = vmatprep.subr.mxu0 0.0
    %249 = vmatpush1.msra.mxu0 0.0
    %250 = vmatprep.subr.mxu0 0.0
    %251 = vmatpush1.msra.mxu0 0.0
    %252 = vmatprep.subr.mxu0 0.0
    %253 = vmatpush1.msra.mxu0 0.0
    %254 = vmatprep.subr.mxu0 0.0
    %255 = vmatpush1.msra.mxu0 0.0
    %256 = vmatprep.subr.mxu0 0.0
    %257 = vmatpush1.msra.mxu0 0.0
    %258 = vmatprep.mubr.f32.mxu0 0.0
    %259 = vmatmul.mubr.f32.gmra.mrb[0].mxu0 %v57
    %v260 = vpop.f32.mrb[0].mxu0
    %v261 = vadd.f32 %v119, %v260
    %v262 = vpop.f32.mrb[0].mxu0
    %263 = vdwg.mxu0
    %v264 = vmul.f32 %v190, %v192
    %v265 = vld [vmem:[#allocation7] sm:$0xff]
    %v266 = vld [vmem:[#allocation7 + $0x8] sm:$0xff]
    %v267 = vld [vmem:[#allocation7 + $0x10] sm:$0xff]
    %v268 = vld [vmem:[#allocation7 + $0x18] sm:$0xff]
    %v269 = vld [vmem:[#allocation7 + $0x20] sm:$0xff]
    %v270 = vld [vmem:[#allocation7 + $0x28] sm:$0xff]
    %v271 = vld [vmem:[#allocation7 + $0x30] sm:$0xff]
    %v272 = vld [vmem:[#allocation7 + $0x38] sm:$0xff]
    %v273 = vld [vmem:[#allocation7 + $0x40] sm:$0xff]
    %v274 = vld [vmem:[#allocation7 + $0x48] sm:$0xff]
    %v275 = vld [vmem:[#allocation7 + $0x50] sm:$0xff]
    %v276 = vld [vmem:[#allocation7 + $0x58] sm:$0xff]
    %v277 = vld [vmem:[#allocation7 + $0x60] sm:$0xff]
    %v278 = vld [vmem:[#allocation7 + $0x68] sm:$0xff]
    %v279 = vld [vmem:[#allocation7 + $0x70] sm:$0xff]
    %v280 = vld [vmem:[#allocation7 + $0x78] sm:$0xff]
    %281 = vmatprep.subr.mxu0 0.0
    %282 = vmatpush1.msra.mxu0 %v265
    %283 = vmatprep.subr.mxu0 0.0
    %284 = vmatpush1.msra.mxu0 %v266
    %285 = vmatprep.subr.mxu0 0.0
    %286 = vmatpush1.msra.mxu0 %v267
    %287 = vmatprep.subr.mxu0 0.0
    %288 = vmatpush1.msra.mxu0 %v268
    %289 = vmatprep.subr.mxu0 0.0
    %290 = vmatpush1.msra.mxu0 %v269
    %291 = vmatprep.subr.mxu0 0.0
    %292 = vmatpush1.msra.mxu0 %v270
    %293 = vmatprep.subr.mxu0 0.0
    %294 = vmatpush1.msra.mxu0 %v271
    %295 = vmatprep.subr.mxu0 0.0
    %296 = vmatpush1.msra.mxu0 %v272
    %297 = vmatprep.subr.mxu0 0.0
    %298 = vmatpush1.msra.mxu0 %v273
    %299 = vmatprep.subr.mxu0 0.0
    %300 = vmatpush1.msra.mxu0 %v274
    %301 = vmatprep.subr.mxu0 0.0
    %302 = vmatpush1.msra.mxu0 %v275
    %303 = vmatprep.subr.mxu0 0.0
    %304 = vmatpush1.msra.mxu0 %v276
    %305 = vmatprep.subr.mxu0 0.0
    %306 = vmatpush1.msra.mxu0 %v277
    %307 = vmatprep.subr.mxu0 0.0
    %308 = vmatpush1.msra.mxu0 %v278
    %309 = vmatprep.subr.mxu0 0.0
    %310 = vmatpush1.msra.mxu0 %v279
    %311 = vmatprep.subr.mxu0 0.0
    %312 = vmatpush1.msra.mxu0 %v280
    %313 = vmatprep.subr.mxu0 0.0
    %314 = vmatpush1.msra.mxu0 0.0
    %315 = vmatprep.subr.mxu0 0.0
    %316 = vmatpush1.msra.mxu0 0.0
    %317 = vmatprep.subr.mxu0 0.0
    %318 = vmatpush1.msra.mxu0 0.0
    %319 = vmatprep.subr.mxu0 0.0
    %320 = vmatpush1.msra.mxu0 0.0
    %321 = vmatprep.subr.mxu0 0.0
    %322 = vmatpush1.msra.mxu0 0.0
    %323 = vmatprep.subr.mxu0 0.0
    %324 = vmatpush1.msra.mxu0 0.0
    %325 = vmatprep.subr.mxu0 0.0
    %326 = vmatpush1.msra.mxu0 0.0
    %327 = vmatprep.subr.mxu0 0.0
    %328 = vmatpush1.msra.mxu0 0.0
    %329 = vmatprep.subr.mxu0 0.0
    %330 = vmatpush1.msra.mxu0 0.0
    %331 = vmatprep.subr.mxu0 0.0
    %332 = vmatpush1.msra.mxu0 0.0
    %333 = vmatprep.subr.mxu0 0.0
    %334 = vmatpush1.msra.mxu0 0.0
    %335 = vmatprep.subr.mxu0 0.0
    %336 = vmatpush1.msra.mxu0 0.0
    %337 = vmatprep.subr.mxu0 0.0
    %338 = vmatpush1.msra.mxu0 0.0
    %339 = vmatprep.subr.mxu0 0.0
    %340 = vmatpush1.msra.mxu0 0.0
    %341 = vmatprep.subr.mxu0 0.0
    %342 = vmatpush1.msra.mxu0 0.0
    %343 = vmatprep.subr.mxu0 0.0
    %344 = vmatpush1.msra.mxu0 0.0
    %345 = vmatprep.mubr.f32.mxu0 0.0
    %346 = vmatmul.mubr.f32.gmra.mrb[0].mxu0 %v264
    %v347 = vpop.f32.mrb[0].mxu0
    %v348 = vadd.f32 0.0, %v347
    %v349 = vpop.f32.mrb[0].mxu0
    %350 = vdwg.mxu0
    %v351 = vmul.f32 %v348, 0.17677669
    %v352 = vadd.f32 %v351, 1.0
    %v353 = vand.u32 2147483647, %v352
    %vm354 = vcmp.lt.f32.partialorder %v353, inf
    %v355 = vsel %vm354, 1.0, nan
    %v356 = vmul.f32 %v355, %v261
    %357 = vst [vmem:[#allocation8] sm:$0xf] %v356
    // Predicated region
    $region30: #{tpu_custom_call.1} parent=1 // pred_check
      _
    $region31: #{tpu_custom_call.1} parent=1 // pred_check_branch
      %359 = sbr.rel (0) target = $region33
    $region32: #{tpu_custom_call.1} parent=1 // pred_region
      %s361 = ssub.s32 64, 64
      %362 = vsyncadd [#allocation4], %s361
      %s364 = sshll.u32 [#allocation8], 4
      %s365 = int_to_ptr.vmem [resolvable:$true] %s364
      %367 = dma.vmem_to_hbm [thread:$0]  %s365, 64, %s4, [#allocation4]
    $region33: #{tpu_custom_call.1} parent=1 // pred_fallthru
      _
    // Predicated region
    $region34: #{tpu_custom_call.1} parent=1 // pred_check
      _
    $region35: #{tpu_custom_call.1} parent=1 // pred_check_branch
      %369 = sbr.rel (0) target = $region37
    $region36: #{tpu_custom_call.1} parent=1 // pred_region
      %370 = dma.done [#allocation4], 64
    $region37: #{tpu_custom_call.1} parent=1 // pred_fallthru
      _
    %371 = vsyncpa [#allocation3], 1
    %372 = vsyncpa [#allocation6], 1
    %373 = vsyncpa [#allocation4], 1

</llo_original>
